<compile_context>
chip_gen: v5e
topology: v5e:2x2
jax: 0.10.0
libtpu: 0.0.40
codegen_flags: <defaults>
</compile_context>

<pallas_src>
import math

import jax
import jax.numpy as jnp
from jax.experimental import pallas as pl
from jax.experimental.pallas import tpu as pltpu

_LANE = 128
# VMEM working-set budget for blocks+scratch (fits v7x's 64 MiB physical VMEM
# with headroom; v5e/v6e have 128 MiB so this is always safe).
_BLOCK_VMEM_BUDGET = 40 * 1024 * 1024


def _round_up(v, m):
    return (v + m - 1) // m * m


def _att_fusion_kernel(off_ref, rl_ref, x_ref, o_ref, q_sc, m_sc, l_sc, acc_sc):
    """One grid step = (group b, spatial tile nt, agent j).

    off_ref : SMEM (B,) int32       -- per-group start row (scalar prefetch)
    rl_ref  : SMEM (B,) int32       -- record_len          (scalar prefetch)
    x_ref   : VMEM (1, C, TILE_N)   -- agent j's feature tile of group b
    o_ref   : VMEM (1, C, TILE_N)   -- fused ego feature tile (resident over j)
    q_sc    : VMEM (C, TILE_N) f32  -- ego tile pre-scaled by 1/sqrt(C)
    m_sc    : VMEM (1, TILE_N) f32  -- running max of scores
    l_sc    : VMEM (1, TILE_N) f32  -- running softmax denominator
    acc_sc  : VMEM (C, TILE_N) f32  -- running unnormalized context
    """
    b = pl.program_id(0)
    j = pl.program_id(2)
    n_cav = rl_ref[b]

    C = x_ref.shape[1]
    inv_sqrt_dim = 1.0 / math.sqrt(C)     # ScaledDotProductAttention(dim=C)

    @pl.when(j == 0)
    def _init():
        # Agent 0 is the ego agent: query == key == value row 0.
        x0 = x_ref[0].astype(jnp.float32)                        # (C, TILE_N)
        q0 = x0 * inv_sqrt_dim                                   # fold scale into q
        q_sc[...] = q0
        s0 = jnp.sum(q0 * x0, axis=0, keepdims=True)             # (1, TILE_N)
        m_sc[...] = s0                                           # running max
        l_sc[...] = jnp.full(l_sc.shape, 1.0, dtype=l_sc.dtype)  # exp(s0 - s0)
        acc_sc[...] = x0                                         # 1 * v0

    @pl.when(jnp.logical_and(j > 0, j < n_cav))
    def _accumulate():
        # NOTE(v7x): once inputs are bf16-resident this loop becomes VALU-bound;
        # the two (C, TILE_N) multiplies could run in packed bf16 there.  Kept
        # in f32 for portability (v5e has no bf16 VALU) and exact parity.
        xj = x_ref[0].astype(jnp.float32)                        # (C, TILE_N)
        sj = jnp.sum(q_sc[...] * xj, axis=0, keepdims=True)      # (1, TILE_N)
        m_old = m_sc[...]
        m_new = jnp.maximum(m_old, sj)
        a = jnp.exp(m_old - m_new)
        p = jnp.exp(sj - m_new)
        l_sc[...] = a * l_sc[...] + p
        acc_sc[...] = a * acc_sc[...] + p * xj
        m_sc[...] = m_new

    @pl.when(j == pl.num_programs(2) - 1)
    def _finalize():
        # Exact reciprocal: runs once per (b, nt) tile, EUP slot -> free, and
        # keeps parity with the PyTorch reference tight.
        inv_l = pl.reciprocal(l_sc[...], approx=False)
        o_ref[0] = (acc_sc[...] * inv_l).astype(o_ref.dtype)


def _pick_tile_n(N, max_lanes, prefer_split):
    """Largest lane-dense tile that divides N (no host pad). Returns (tile, pad?)."""
    if N % _LANE == 0:
        base = N // _LANE
        cap = max(1, max_lanes // _LANE)
        best = 1
        for d in range(1, base + 1):
            if base % d or d > cap:
                continue
            if prefer_split and base > 1 and d == base:
                continue          # keep >= 2 spatial tiles when B == 1 (v7x 2-core)
            best = d
        return _LANE * best, False
    if N <= max_lanes:
        return N, False           # block == full array dim (allowed by (8,128) rule)
    # Rare fallback: W*H not 128-aligned AND too large for a single block.
    return max(_LANE, max_lanes // _LANE * _LANE), True


def att_fusion(x, record_len, *, max_cav=None, tile_n=None):
    """x: (sum(record_len), C, W, H); record_len: python list of ints.

    Pass `max_cav` as a fixed config constant in a serving loop so the grid
    shape (and hence the compiled kernel) does not change with record_len.
    If x is already bf16-resident in HBM, pass it as-is (do NOT cast here):
    the kernel upcasts in-kernel and HBM traffic is halved.
    """
    record_len = [int(r) for r in record_len]
    assert all(r >= 1 for r in record_len), "every group needs at least the ego agent"
    B = len(record_len)
    total, C, W, H = x.shape
    N = W * H
    if max_cav is None:
        max_cav = max(record_len)
    assert max(record_len) <= max_cav

    # Per-group start offsets (exclusive cumsum) — scalar-prefetched to SMEM.
    offsets = [0]
    for r in record_len[:-1]:
        offsets.append(offsets[-1] + r)
    off = jnp.asarray(offsets, dtype=jnp.int32)
    rl = jnp.asarray(record_len, dtype=jnp.int32)

    x2 = x.reshape(total, C, N)

    # Per-lane-column VMEM bytes: double-buffered input block + double-buffered
    # output block + f32 scratch (q_sc, acc_sc, m_sc, l_sc).
    itemsize = jnp.dtype(x2.dtype).itemsize
    per_lane = 2 * C * itemsize + 2 * C * itemsize + (2 * C + 2) * 4
    max_lanes = max(_LANE, _BLOCK_VMEM_BUDGET // per_lane // _LANE * _LANE)

    if tile_n is None:
        tile_n, needs_pad = _pick_tile_n(N, max_lanes, prefer_split=(B == 1))
    else:
        needs_pad = (N % tile_n != 0)

    n_pad = _round_up(N, tile_n) if needs_pad else N
    if needs_pad:
        # TODO(synk): replace this rare fallback (non-128-aligned W*H that does
        # not fit a single block) with an in-kernel masked final store; for all
        # realistic v2xvit feature maps this path never runs.
        x2 = jnp.pad(x2, ((0, 0), (0, 0), (0, n_pad - N)))
    n_tiles = n_pad // tile_n

    working_set = per_lane * tile_n
    vmem_limit = int(min(56 << 20, max(32 << 20, working_set + (8 << 20))))

    out = pl.pallas_call(
        _att_fusion_kernel,
        out_shape=jax.ShapeDtypeStruct((B, C, n_pad), x.dtype),
        grid_spec=pltpu.PrefetchScalarGridSpec(
            num_scalar_prefetch=2,
            grid=(B, n_tiles, max_cav),
            in_specs=[
                # Gather agent rows straight out of the un-regrouped x:
                # row = off[b] + min(j, rl[b]-1); invalid j re-reads the last
                # valid row (in bounds; unchanged block index -> no re-DMA).
                pl.BlockSpec(
                    (1, C, tile_n),
                    lambda b, nt, j, off_ref, rl_ref: (
                        off_ref[b] + jnp.minimum(j, rl_ref[b] - 1), 0, nt)),
            ],
            out_specs=pl.BlockSpec(
                (1, C, tile_n),
                lambda b, nt, j, off_ref, rl_ref: (b, 0, nt)),
            scratch_shapes=[
                pltpu.VMEM((C, tile_n), jnp.float32),   # q_sc  (scaled ego tile)
                pltpu.VMEM((1, tile_n), jnp.float32),   # m_sc  (running max)
                pltpu.VMEM((1, tile_n), jnp.float32),   # l_sc  (running denom)
                pltpu.VMEM((C, tile_n), jnp.float32),   # acc_sc (unnorm. ctx)
            ]),
        compiler_params=pltpu.CompilerParams(
            dimension_semantics=("parallel", "parallel", "arbitrary"),
            vmem_limit_bytes=vmem_limit),
    )(off, rl, x2)

    if needs_pad:
        out = out[:, :, :N]
    return out.reshape(B, C, W, H)


def att_fusion_ref(x, record_len):
    """Pure-JAX reference mirroring the PyTorch module exactly."""
    record_len = [int(r) for r in record_len]
    _, C, W, H = x.shape
    N = W * H
    outs = []
    start = 0
    for r in record_len:
        xx = x[start:start + r].reshape(r, C, N)          # (r, C, N)
        xx = jnp.transpose(xx, (2, 0, 1))                 # (N, r, C)
        score = jnp.einsum('nic,njc->nij', xx, xx) / math.sqrt(C)
        attn = jax.nn.softmax(score, axis=-1)
        ctx = jnp.einsum('nij,njc->nic', attn, xx)        # (N, r, C)
        ego = jnp.transpose(ctx[:, 0, :], (1, 0)).reshape(C, W, H)
        outs.append(ego[None])
        start += r
    return jnp.concatenate(outs, axis=0)


if __name__ == "__main__":
    key = jax.random.PRNGKey(0)

    # Case 1: two groups (2 and 3 cavs), C=4, 16x16 feature maps.
    record_len = [2, 3]
    C, W, H = 4, 16, 16
    x = jax.random.normal(key, (sum(record_len), C, W, H), dtype=jnp.float32)

    out = att_fusion(x, record_len)
    out = jax.block_until_ready(out)
    ref = att_fusion_ref(x, record_len)
    assert out.shape == (len(record_len), C, W, H)
    err = float(jnp.max(jnp.abs(out - ref)))
    assert jnp.allclose(out, ref, atol=1e-4, rtol=1e-4), f"max abs err = {err}"

    # Case 2: skewed record_len with a fixed (static) max_cav, exercising the
    # skipped-agent-step path.
    record_len2 = [3, 1, 2]
    x2 = jax.random.normal(jax.random.PRNGKey(1),
                           (sum(record_len2), C, W, H), dtype=jnp.float32)
    out2 = jax.block_until_ready(att_fusion(x2, record_len2, max_cav=4))
    ref2 = att_fusion_ref(x2, record_len2)
    err2 = float(jnp.max(jnp.abs(out2 - ref2)))
    assert jnp.allclose(out2, ref2, atol=1e-4, rtol=1e-4), f"max abs err = {err2}"

    print("KERNEL_OK")
</pallas_src>

<mosaic_0001>
module attributes {stable_mosaic.version = 11 : i64} {
  func.func @_att_fusion_kernel(%arg0: i32, %arg1: i32, %arg2: i32, %arg3: memref<2xi32, #tpu.memory_space<smem>>, %arg4: memref<2xi32, #tpu.memory_space<smem>>, %arg5: memref<1x4x256xf32, #tpu.memory_space<vmem>>, %arg6: memref<1x4x256xf32, #tpu.memory_space<vmem>>, %arg7: memref<4x256xf32, #tpu.memory_space<vmem>>, %arg8: memref<1x256xf32, #tpu.memory_space<vmem>>, %arg9: memref<1x256xf32, #tpu.memory_space<vmem>>, %arg10: memref<4x256xf32, #tpu.memory_space<vmem>>) attributes {dimension_semantics = [#tpu.dimension_semantics<parallel>, #tpu.dimension_semantics<parallel>, #tpu.dimension_semantics<arbitrary>], iteration_bounds = array<i64: 2, 1, 3>, scalar_prefetch = 2 : i64, scratch_operands = 4 : i64, tpu.core_type = #tpu.core_type<tc>, window_params = [{transform_indices = @transform_0, window_bounds = array<i64: 1, 4, 256>}, {transform_indices = @transform_1, window_bounds = array<i64: 1, 4, 256>}]} {
    %0 = arith.index_cast %arg0 : i32 to index
    %1 = memref.load %arg4[%0] : memref<2xi32, #tpu.memory_space<smem>>
    %c0_i32 = arith.constant 0 : i32
    %2 = arith.cmpi eq, %arg2, %c0_i32 : i32
    %3 = arith.extui %2 : i1 to i32
    %c0_i32_0 = arith.constant 0 : i32
    %4 = arith.cmpi ne, %3, %c0_i32_0 : i32
    scf.if %4 {
      %c0 = arith.constant 0 : index
      %c0_4 = arith.constant 0 : index
      %c0_5 = arith.constant 0 : index
      %13 = vector.load %arg5[%c0, %c0_4, %c0_5] : memref<1x4x256xf32, #tpu.memory_space<vmem>>, vector<1x4x256xf32>
      %14 = vector.shape_cast %13 : vector<1x4x256xf32> to vector<4x256xf32>
      %cst = arith.constant 5.000000e-01 : f32
      %15 = vector.broadcast %cst : f32 to vector<4x256xf32>
      %16 = arith.mulf %14, %15 : vector<4x256xf32>
      %c0_6 = arith.constant 0 : index
      %c0_7 = arith.constant 0 : index
      %17 = vector.load %arg7[%c0_6, %c0_7] : memref<4x256xf32, #tpu.memory_space<vmem>>, vector<4x256xf32>
      tpu.vector_store %arg7[%c0_6, %c0_7], %16 {strides = array<i32>} : memref<4x256xf32, #tpu.memory_space<vmem>>, vector<4x256xf32>,
      %18 = arith.mulf %16, %14 : vector<4x256xf32>
      %cst_8 = arith.constant dense<0.000000e+00> : vector<256xf32>
      %19 = vector.multi_reduction <add>, %18, %cst_8 [0] : vector<4x256xf32> to vector<256xf32>
      %20 = vector.shape_cast %19 : vector<256xf32> to vector<1x256xf32>
      %c0_9 = arith.constant 0 : index
      %c0_10 = arith.constant 0 : index
      %21 = vector.load %arg8[%c0_9, %c0_10] : memref<1x256xf32, #tpu.memory_space<vmem>>, vector<1x256xf32>
      tpu.vector_store %arg8[%c0_9, %c0_10], %20 {strides = array<i32>} : memref<1x256xf32, #tpu.memory_space<vmem>>, vector<1x256xf32>,
      %cst_11 = arith.constant 1.000000e+00 : f32
      %22 = vector.broadcast %cst_11 : f32 to vector<1x256xf32>
      %c0_12 = arith.constant 0 : index
      %c0_13 = arith.constant 0 : index
      %23 = vector.load %arg9[%c0_12, %c0_13] : memref<1x256xf32, #tpu.memory_space<vmem>>, vector<1x256xf32>
      tpu.vector_store %arg9[%c0_12, %c0_13], %22 {strides = array<i32>} : memref<1x256xf32, #tpu.memory_space<vmem>>, vector<1x256xf32>,
      %c0_14 = arith.constant 0 : index
      %c0_15 = arith.constant 0 : index
      %24 = vector.load %arg10[%c0_14, %c0_15] : memref<4x256xf32, #tpu.memory_space<vmem>>, vector<4x256xf32>
      tpu.vector_store %arg10[%c0_14, %c0_15], %14 {strides = array<i32>} : memref<4x256xf32, #tpu.memory_space<vmem>>, vector<4x256xf32>,
    } else {
    }
    %c0_i32_1 = arith.constant 0 : i32
    %5 = arith.cmpi sgt, %arg2, %c0_i32_1 : i32
    %6 = arith.cmpi slt, %arg2, %1 : i32
    %7 = arith.andi %5, %6 : i1
    %8 = arith.extui %7 : i1 to i32
    %c0_i32_2 = arith.constant 0 : i32
    %9 = arith.cmpi ne, %8, %c0_i32_2 : i32
    scf.if %9 {
      %c0 = arith.constant 0 : index
      %c0_4 = arith.constant 0 : index
      %c0_5 = arith.constant 0 : index
      %13 = vector.load %arg5[%c0, %c0_4, %c0_5] : memref<1x4x256xf32, #tpu.memory_space<vmem>>, vector<1x4x256xf32>
      %14 = vector.shape_cast %13 : vector<1x4x256xf32> to vector<4x256xf32>
      %c0_6 = arith.constant 0 : index
      %c0_7 = arith.constant 0 : index
      %15 = vector.load %arg7[%c0_6, %c0_7] : memref<4x256xf32, #tpu.memory_space<vmem>>, vector<4x256xf32>
      %16 = arith.mulf %15, %14 : vector<4x256xf32>
      %cst = arith.constant dense<0.000000e+00> : vector<256xf32>
      %17 = vector.multi_reduction <add>, %16, %cst [0] : vector<4x256xf32> to vector<256xf32>
      %18 = vector.shape_cast %17 : vector<256xf32> to vector<1x256xf32>
      %c0_8 = arith.constant 0 : index
      %c0_9 = arith.constant 0 : index
      %19 = vector.load %arg8[%c0_8, %c0_9] : memref<1x256xf32, #tpu.memory_space<vmem>>, vector<1x256xf32>
      %20 = arith.maximumf %19, %18 : vector<1x256xf32>
      %21 = arith.subf %19, %20 : vector<1x256xf32>
      %22 = math.exp %21 : vector<1x256xf32>
      %23 = arith.subf %18, %20 : vector<1x256xf32>
      %24 = math.exp %23 : vector<1x256xf32>
      %c0_10 = arith.constant 0 : index
      %c0_11 = arith.constant 0 : index
      %25 = vector.load %arg9[%c0_10, %c0_11] : memref<1x256xf32, #tpu.memory_space<vmem>>, vector<1x256xf32>
      %26 = arith.mulf %22, %25 : vector<1x256xf32>
      %27 = arith.addf %26, %24 : vector<1x256xf32>
      %c0_12 = arith.constant 0 : index
      %c0_13 = arith.constant 0 : index
      %28 = vector.load %arg9[%c0_12, %c0_13] : memref<1x256xf32, #tpu.memory_space<vmem>>, vector<1x256xf32>
      tpu.vector_store %arg9[%c0_12, %c0_13], %27 {strides = array<i32>} : memref<1x256xf32, #tpu.memory_space<vmem>>, vector<1x256xf32>,
      %c0_14 = arith.constant 0 : index
      %c0_15 = arith.constant 0 : index
      %29 = vector.load %arg10[%c0_14, %c0_15] : memref<4x256xf32, #tpu.memory_space<vmem>>, vector<4x256xf32>
      %30 = vector.broadcast %22 : vector<1x256xf32> to vector<4x256xf32>
      %31 = arith.mulf %30, %29 : vector<4x256xf32>
      %32 = vector.broadcast %24 : vector<1x256xf32> to vector<4x256xf32>
      %33 = arith.mulf %32, %14 : vector<4x256xf32>
      %34 = arith.addf %31, %33 : vector<4x256xf32>
      %c0_16 = arith.constant 0 : index
      %c0_17 = arith.constant 0 : index
      %35 = vector.load %arg10[%c0_16, %c0_17] : memref<4x256xf32, #tpu.memory_space<vmem>>, vector<4x256xf32>
      tpu.vector_store %arg10[%c0_16, %c0_17], %34 {strides = array<i32>} : memref<4x256xf32, #tpu.memory_space<vmem>>, vector<4x256xf32>,
      %c0_18 = arith.constant 0 : index
      %c0_19 = arith.constant 0 : index
      %36 = vector.load %arg8[%c0_18, %c0_19] : memref<1x256xf32, #tpu.memory_space<vmem>>, vector<1x256xf32>
      tpu.vector_store %arg8[%c0_18, %c0_19], %20 {strides = array<i32>} : memref<1x256xf32, #tpu.memory_space<vmem>>, vector<1x256xf32>,
    } else {
    }
    %c2_i32 = arith.constant 2 : i32
    %10 = arith.cmpi eq, %arg2, %c2_i32 : i32
    %11 = arith.extui %10 : i1 to i32
    %c0_i32_3 = arith.constant 0 : i32
    %12 = arith.cmpi ne, %11, %c0_i32_3 : i32
    scf.if %12 {
      %c0 = arith.constant 0 : index
      %c0_4 = arith.constant 0 : index
      %13 = vector.load %arg9[%c0, %c0_4] : memref<1x256xf32, #tpu.memory_space<vmem>>, vector<1x256xf32>
      %14 = tpu.reciprocal %13 : vector<1x256xf32> -> vector<1x256xf32>
      %c0_5 = arith.constant 0 : index
      %c0_6 = arith.constant 0 : index
      %15 = vector.load %arg10[%c0_5, %c0_6] : memref<4x256xf32, #tpu.memory_space<vmem>>, vector<4x256xf32>
      %16 = vector.broadcast %14 : vector<1x256xf32> to vector<4x256xf32>
      %17 = arith.mulf %15, %16 : vector<4x256xf32>
      %c0_7 = arith.constant 0 : index
      %c0_8 = arith.constant 0 : index
      %c0_9 = arith.constant 0 : index
      %18 = vector.load %arg6[%c0_7, %c0_8, %c0_9] : memref<1x4x256xf32, #tpu.memory_space<vmem>>, vector<1x4x256xf32>
      %19 = vector.shape_cast %18 : vector<1x4x256xf32> to vector<4x256xf32>
      %20 = vector.shape_cast %17 : vector<4x256xf32> to vector<1x4x256xf32>
      tpu.vector_store %arg6[%c0_7, %c0_8, %c0_9], %20 {strides = array<i32>} : memref<1x4x256xf32, #tpu.memory_space<vmem>>, vector<1x4x256xf32>,
    } else {
    }
    return
  }
  func.func @transform_0(%arg0: i32, %arg1: i32, %arg2: i32, %arg3: memref<2xi32, #tpu.memory_space<smem>>, %arg4: memref<2xi32, #tpu.memory_space<smem>>) -> (i32, i32, i32) {
    %0 = arith.index_cast %arg0 : i32 to index
    %1 = memref.load %arg3[%0] : memref<2xi32, #tpu.memory_space<smem>>
    %2 = arith.index_cast %arg0 : i32 to index
    %3 = memref.load %arg4[%2] : memref<2xi32, #tpu.memory_space<smem>>
    %c1_i32 = arith.constant 1 : i32
    %4 = arith.subi %3, %c1_i32 : i32
    %5 = arith.minsi %arg2, %4 : i32
    %6 = arith.addi %1, %5 : i32
    %c0_i32 = arith.constant 0 : i32
    %c0_i32_0 = arith.constant 0 : i32
    return %6, %c0_i32, %arg1 : i32, i32, i32
  }
  func.func @transform_1(%arg0: i32, %arg1: i32, %arg2: i32, %arg3: memref<2xi32, #tpu.memory_space<smem>>, %arg4: memref<2xi32, #tpu.memory_space<smem>>) -> (i32, i32, i32) {
    %c0_i32 = arith.constant 0 : i32
    %c0_i32_0 = arith.constant 0 : i32
    return %arg0, %c0_i32, %arg1 : i32, i32, i32
  }
}

</mosaic_0001>

<llo_original>
// kernel: tpu_custom_call.1
$region0: #{tpu_custom_call.1}
  #allocation0 [shape = 'u32[]', space=smem, size = 0x4, offset = 0x4, fixed_abs, tag = 'smem constant byte address 0x4 - core index']
  #allocation1 [shape = 'u32[72,128]{1,0:T(1,128)}', space=vmem, size = 0x9000, scoped, tag = 'internal scratch']
  #allocation2 [shape = 'f32[4,256]{1,0:T(4,128)}', space=vmem, size = 0x1000, scoped, tag = 'scratch operand']
  #allocation3 [shape = 'f32[1,256]{1,0:T(1,128)}', space=vmem, size = 0x400, scoped, tag = 'scratch operand']
  #allocation4 [shape = 'f32[1,256]{1,0:T(1,128)}', space=vmem, size = 0x400, scoped, tag = 'scratch operand']
  #allocation5 [shape = 'f32[4,256]{1,0:T(4,128)}', space=vmem, size = 0x1000, scoped, tag = 'scratch operand']
  #allocation6 [shape = 's32[1]{0}', space=sflag, size = 0x4, scoped, tag = 'scoped memory for tpu_custom_call.1']
  #allocation7 [shape = 'u8[512]{0}', space=smem, size = 0x200, scoped, tag = 'prefetched SMEM operand 0']
  #allocation8 [shape = 'u8[512]{0}', space=smem, size = 0x200, scoped, tag = 'prefetched SMEM operand 1']
  %s0 = inlined_call_operand.hbm [shape: s32[2], index: 0, kind: input, shape index: {}]
  %s1 = inlined_call_operand.hbm [shape: s32[2], index: 1, kind: input, shape index: {}]
  %s2 = inlined_call_operand.hbm [shape: f32[5,4,256], index: 2, kind: input, shape index: {}]
  %s3 = inlined_call_operand.hbm [shape: f32[2,4,256], index: 3, kind: output, shape index: {}]
  %s4 = sld [smem:[#allocation0]]
  $region53: #{tpu_custom_call.1} parent=0
    _
  %s6 = ssub.s32 1, %s4
  %s7 = scalar_select 0, %s6, %s4
  %s9 = sshll.u32 %s0, 4
  %s10 = int_to_ptr.hbm [resolvable:$true] %s9
  %12 = dma.hbm_to_smem %s10, 16, [#allocation7], [#allocation6]
  %s14 = sshll.u32 %s1, 4
  %s15 = int_to_ptr.hbm [resolvable:$true] %s14
  %17 = dma.hbm_to_smem %s15, 16, [#allocation8], [#allocation6]
  %19 = dma.done [#allocation6], 32
  %20 = sfence
  $region1: #{tpu_custom_call.1} parent=0
    #allocation9 [shape = 'u8[8192]{0}', space=vmem, size = 0x2000, scoped, tag = 'input window, operand 2']
    #allocation10 [shape = 's32[2]{0}', space=sflag, size = 0x8, scoped, tag = 'scoped memory for tpu_custom_call.1']
    #allocation11 [shape = 's32[2]{0}', space=sflag, size = 0x8, scoped, tag = 'scoped memory for tpu_custom_call.1']
    #allocation12 [shape = 'u8[8192]{0}', space=vmem, size = 0x2000, scoped, tag = 'output window, operand 0']
    %21 = vsyncpa [#allocation10], 0
    %s22 = scalar_lea.sflag [#allocation10], 1
    %23 = vsyncpa %s22, 0
    %24 = vsyncpa [#allocation11], 0
    %s25 = scalar_lea.sflag [#allocation11], 1
    %26 = vsyncpa %s25, 0
    loop: start=0, step=1, limit=8
    $region2: #{tpu_custom_call.1} parent=1 // loop_pre_header
      _
    $region3: #{tpu_custom_call.1} parent=1 // loop_header
      %s28 = sphi 0, %s32
      %p29 = scmp.ge.s32.totalorder %s28, 8
      %s35 = sphi 0, %s54
      %s36 = sphi 0, %s50
      %s37 = sphi 0, %s46
      %s38 = sphi 0, %s35
      %s39 = sphi 0, %s36
      %s40 = sphi 0, %s37
      %s41 = sphi 0, %s38
      %s42 = sphi 0, %s39
      %s43 = sphi 0, %s40
      %s71 = sphi 0, %s73
      %s74 = sphi 0, %s71
      %s75 = sphi 0, %s74
      %s91 = sphi 0, %s75
      %s99 = sphi 0, %s101
      %s102 = sphi 0, %s99
      %s103 = sphi 0, %s102
      %s119 = sphi 0, %s103
    $region4: #{tpu_custom_call.1} parent=1 // loop_header_branch
      %31 = sbr.rel (%p29) target = $region8
    $region5: #{tpu_custom_call.1} parent=1 // loop_body
      %s33 = ssub.s32 %s28, 1
      %s34 = ssub.s32 %s28, 2
      %s44 = sadd.s32 1, %s37
      %p45 = scmp.ge.s32.totalorder %s44, 3
      %s46 = scalar_select %p45, 0, %s44
      %s47 = sadd.s32 1, %s36
      %s48 = scalar_select %p45, %s47, %s36
      %p49 = scmp.ge.s32.totalorder %s48, 1
      %s50 = scalar_select %p49, 0, %s48
      %s51 = sadd.s32 1, %s35
      %s52 = scalar_select %p49, %s51, %s35
      %p53 = scmp.ge.s32.totalorder %s52, 2
      %s54 = scalar_select %p53, 0, %s52
      %s55 = sld [smem:[#allocation7 + %s35]]
      %s56 = sld [smem:[#allocation8 + %s35]]
      %s57 = ssub.s32 %s56, 1
      %p58 = scmp.lt.s32.totalorder %s37, %s57
      %s59 = scalar_select %p58, %s37, %s57
      %s60 = sadd.s32 %s55, %s59
      %s61 = sld [smem:[#allocation7 + %s54]]
      %s62 = sld [smem:[#allocation8 + %s54]]
      %s63 = ssub.s32 %s62, 1
      %p64 = scmp.lt.s32.totalorder %s46, %s63
      %s65 = scalar_select %p64, %s46, %s63
      %s66 = sadd.s32 %s61, %s65
      %s67 = ssub.s32 %s60, %s66
      %s68 = ssub.s32 %s36, %s50
      %s69 = sor.u32 %s67, %s68
      %p70 = scmp.eq.s32.totalorder %s69, 0
      %s72 = sadd.s32 %s71, 1
      %s73 = scalar_select %p70, %s71, %s72
      %p76 = pneg %p70
      %p77 = scmp.eq.s32.totalorder %s28, 5
      %p78 = por %p76, %p77
      %p79 = scmp.ne.s32.totalorder %s71, %s74
      %p80 = scmp.eq.s32.totalorder %s28, 0
      %p81 = por %p79, %p80
      %p82 = scmp.ne.s32.totalorder %s71, %s74
      %p83 = scmp.eq.s32.totalorder %s33, 5
      %p84 = por %p82, %p83
      %p85 = scmp.ne.s32.totalorder %s74, %s75
      %p86 = scmp.eq.s32.totalorder %s33, 0
      %p87 = por %p85, %p86
      %p88 = scmp.ne.s32.totalorder %s74, %s75
      %p89 = scmp.eq.s32.totalorder %s34, 5
      %p90 = por %p88, %p89
      %p92 = scmp.ne.s32.totalorder %s75, %s91
      %p93 = scmp.eq.s32.totalorder %s34, 0
      %p94 = por %p92, %p93
      %s95 = ssub.s32 %s35, %s54
      %s96 = ssub.s32 %s36, %s50
      %s97 = sor.u32 %s95, %s96
      %p98 = scmp.eq.s32.totalorder %s97, 0
      %s100 = sadd.s32 %s99, 1
      %s101 = scalar_select %p98, %s99, %s100
      %p104 = pneg %p98
      %p105 = scmp.eq.s32.totalorder %s28, 5
      %p106 = por %p104, %p105
      %p107 = scmp.ne.s32.totalorder %s99, %s102
      %p108 = scmp.eq.s32.totalorder %s28, 0
      %p109 = por %p107, %p108
      %p110 = scmp.ne.s32.totalorder %s99, %s102
      %p111 = scmp.eq.s32.totalorder %s33, 5
      %p112 = por %p110, %p111
      %p113 = scmp.ne.s32.totalorder %s102, %s103
      %p114 = scmp.eq.s32.totalorder %s33, 0
      %p115 = por %p113, %p114
      %p116 = scmp.ne.s32.totalorder %s102, %s103
      %p117 = scmp.eq.s32.totalorder %s34, 5
      %p118 = por %p116, %p117
      %p120 = scmp.ne.s32.totalorder %s103, %s119
      %p121 = scmp.eq.s32.totalorder %s34, 0
      %p122 = por %p120, %p121
      %p123 = scmp.le.s32.totalorder 1, %s28
      %p124 = scmp.lt.s32.totalorder %s28, 7
      %p125 = pnand %p123, %p124
      %p126 = pneg %p125
      // Predicated region
      $region9: #{tpu_custom_call.1} parent=5 // pred_check
        _
      $region10: #{tpu_custom_call.1} parent=5 // pred_check_branch
        %128 = sbr.rel (%p125) target = $region12
      $region11: #{tpu_custom_call.1} parent=5 // pred_region
        %s129 = ssub.s32 %s28, 1
      $region12: #{tpu_custom_call.1} parent=5 // pred_fallthru
        _
      %p130 = scmp.lt.s32.totalorder %s28, 6
      // Predicated region
      $region13: #{tpu_custom_call.1} parent=5 // pred_check
        %p131 = pneg %p130
      $region14: #{tpu_custom_call.1} parent=5 // pred_check_branch
        %133 = sbr.rel (%p131) target = $region16
      $region15: #{tpu_custom_call.1} parent=5 // pred_region
        // Predicated region
        $region17: #{tpu_custom_call.1} parent=15 // pred_check
          %p134 = pneg %p81
        $region18: #{tpu_custom_call.1} parent=15 // pred_check_branch
          %136 = sbr.rel (%p134) target = $region20
        $region19: #{tpu_custom_call.1} parent=15 // pred_region
          %s137 = sand.u32 %s71, 1
          %s138 = scalar_lea.sflag [#allocation10], %s137
          %s139 = sand.u32 %s71, 1
          %s140 = smul.addr %s139, 8
          %s141 = scalar_lea.vmem [#allocation9], %s140
          %s142 = sld [smem:[#allocation7 + %s35]]
          %s143 = sld [smem:[#allocation8 + %s35]]
          %s144 = ssub.s32 %s143, 1
          %p145 = scmp.lt.s32.totalorder %s37, %s144
          %s146 = scalar_select %p145, %s37, %s144
          %s147 = sadd.s32 %s142, %s146
          %s148 = smul.u32 2, %s36
          %150 = vsyncadd %s138, 0
          %s151 = smul.addr %s147, 2
          %s152 = sadd.s32 %s148, %s151
          %s153 = smul.addr %s152, 4
          %s154 = scalar_lea.hbm %s2, %s153
          %s156 = sshll.u32 %s154, 4
          %s157 = int_to_ptr.hbm [resolvable:$true] %s156
          %s158 = sshll.u32 %s141, 4
          %s159 = int_to_ptr.vmem [resolvable:$true] %s158
          %161 = dma.hbm_to_vmem [thread:$0]  %s157, 128, %s159, %s138
        $region20: #{tpu_custom_call.1} parent=15 // pred_fallthru
          _
      $region16: #{tpu_custom_call.1} parent=5 // pred_fallthru
        _
      %p162 = scmp.le.s32.totalorder 1, %s28
      %p163 = scmp.lt.s32.totalorder %s28, 7
      %p164 = pnand %p162, %p163
      %p165 = pneg %p164
      // Predicated region
      $region21: #{tpu_custom_call.1} parent=5 // pred_check
        _
      $region22: #{tpu_custom_call.1} parent=5 // pred_check_branch
        %167 = sbr.rel (%p164) target = $region24
      $region23: #{tpu_custom_call.1} parent=5 // pred_region
        %s168 = ssub.s32 %s28, 1
        %s169 = sand.u32 %s74, 1
        %s170 = scalar_lea.sflag [#allocation10], %s169
        %s171 = sand.u32 %s74, 1
        %s172 = smul.addr %s171, 8
        %s173 = scalar_lea.vmem [#allocation9], %s172
        // Predicated region
        $region25: #{tpu_custom_call.1} parent=23 // pred_check
          %p174 = pneg %p87
        $region26: #{tpu_custom_call.1} parent=23 // pred_check_branch
          %176 = sbr.rel (%p174) target = $region28
        $region27: #{tpu_custom_call.1} parent=23 // pred_region
          %178 = dma.done %s170, 128
        $region28: #{tpu_custom_call.1} parent=23 // pred_fallthru
          _
        %s179 = sand.u32 %s74, 1
        %s180 = scalar_lea.sflag [#allocation10], %s179
        %s181 = sand.u32 %s74, 1
        %s182 = smul.addr %s181, 8
        %s183 = scalar_lea.vmem [#allocation9], %s182
        %p184 = pneg %p87
        %p185 = pneg %p84
        %p186 = pneg %p115
        %p187 = pneg %p112
        %s188 = sand.u32 %s102, 1
        %s189 = scalar_lea.sflag [#allocation11], %s188
        %s190 = sand.u32 %s102, 1
        %s191 = smul.addr %s190, 8
        %s192 = scalar_lea.vmem [#allocation12], %s191
        %s193 = sld [smem:[#allocation7 + %s38]]
        %s194 = sld [smem:[#allocation8 + %s38]]
        %s195 = ssub.s32 %s194, 1
        %p196 = scmp.lt.s32.totalorder %s40, %s195
        %s197 = scalar_select %p196, %s40, %s195
        %s198 = sadd.s32 %s193, %s197
        %s199 = smul.u32 2, %s39
        %s200 = smul.u32 2, %s39
        %s201 = sld [smem:[#allocation8 + %s38]]
        %p202 = scmp.eq.s32.totalorder %s40, 0
        // Predicated region
        $region29: #{tpu_custom_call.1} parent=23 // pred_check
          %p203 = pneg %p202
        $region30: #{tpu_custom_call.1} parent=23 // pred_check_branch
          %205 = sbr.rel (%p203) target = $region32
        $region31: #{tpu_custom_call.1} parent=23 // pred_region
          %v206 = vld [vmem:[%s173] sm:$0xff]
          %v207 = vmul.f32 %v206, 0.5
          %208 = vst [vmem:[#allocation2] sm:$0xff] %v207
          %v209 = vmul.f32 %v207, %v206
          %211 = vst [vmem:[#allocation1] ss:$2 sm:$0xff] %v209
          %v212 = vld.sshfl [vmem:[#allocation1] sm:$0xff pattern:$0x75316420]
          %v213 = vld.sshfl [vmem:[#allocation1 + $0x8] sm:$0xff pattern:$0x75316420]
          %vm216 = vcmask 1043456
          %v217 = vsel %vm216, %v212, 0.0
          %v218 = vrot.slane %v217, 4
          %v219 = vadd.f32 %v217, %v218
          %v220 = vrot.slane %v219, 2
          %v221 = vadd.f32 %v219, %v220
          %v222 = vrot.slane %v221, 1
          %v223 = vadd.f32 %v221, %v222
          %v224 = vsel %vm216, %v213, 0.0
          %v225 = vrot.slane %v224, 4
          %v226 = vadd.f32 %v224, %v225
          %v227 = vrot.slane %v226, 2
          %v228 = vadd.f32 %v226, %v227
          %v229 = vrot.slane %v228, 1
          %v230 = vadd.f32 %v228, %v229
          %v233 = vrot.slane %v230, 7
          %vm234 = vcmask 1040384
          %v235 = vsel %vm234, %v223, %v233
          %v237 = vlaneseq
          %vm238 = vcmp.ge.s32.totalorder %v237, 0
          %vm239 = vcmp.lt.s32.totalorder %v237, 256
          %vm240 = vmand %vm238, %vm239
          %241 = vst.msk [vmem:[#allocation3] sm:$0x3] %vm240, %v235
          %242 = vst.msk [vmem:[#allocation4] sm:$0x3] %vm240, 1.0
          %243 = vst [vmem:[#allocation5] sm:$0xff] %v206
        $region32: #{tpu_custom_call.1} parent=23 // pred_fallthru
          _
        %p244 = scmp.gt.s32.totalorder %s40, 0
        %p245 = scmp.lt.s32.totalorder %s40, %s201
        %p246 = pnand %p244, %p245
        %p247 = pneg %p246
        // Predicated region
        $region33: #{tpu_custom_call.1} parent=23 // pred_check
          _
        $region34: #{tpu_custom_call.1} parent=23 // pred_check_branch
          %249 = sbr.rel (%p246) target = $region36
        $region35: #{tpu_custom_call.1} parent=23 // pred_region
          %v250 = vld [vmem:[%s173] sm:$0xff]
          %v251 = vld [vmem:[#allocation2] sm:$0xff]
          %v252 = vmul.f32 %v251, %v250
          %254 = vst [vmem:[#allocation1] ss:$2 sm:$0xff] %v252
          %v255 = vld.sshfl [vmem:[#allocation1] sm:$0xff pattern:$0x75316420]
          %v256 = vld.sshfl [vmem:[#allocation1 + $0x8] sm:$0xff pattern:$0x75316420]
          %vm259 = vcmask 1043456
          %v260 = vsel %vm259, %v255, 0.0
          %v261 = vrot.slane %v260, 4
          %v262 = vadd.f32 %v260, %v261
          %v263 = vrot.slane %v262, 2
          %v264 = vadd.f32 %v262, %v263
          %v265 = vrot.slane %v264, 1
          %v266 = vadd.f32 %v264, %v265
          %v267 = vsel %vm259, %v256, 0.0
          %v268 = vrot.slane %v267, 4
          %v269 = vadd.f32 %v267, %v268
          %v270 = vrot.slane %v269, 2
          %v271 = vadd.f32 %v269, %v270
          %v272 = vrot.slane %v271, 1
          %v273 = vadd.f32 %v271, %v272
          %v274 = vld [vmem:[#allocation3] sm:$0x3]
          %v277 = vrot.slane %v273, 7
          %vm278 = vcmask 1040384
          %v279 = vsel %vm278, %v266, %v277
          %v281 = vmax.f32 %v274, %v279
          %v282 = vsub.f32 %v274, %v281
          %v283 = vmul.f32 %v282, 1.442695
          %v284 = vpow.pop %v283
          %v286 = vperm.slane %v281, 0
          %v287 = vperm.slane %v281, 1
          %v290 = vsub.f32 %v266, %v286
          %v291 = vsub.f32 %v273, %v287
          %v292 = vmul.f32 %v290, 1.442695
          %v293 = vpow.pop %v292
          %v294 = vmul.f32 %v291, 1.442695
          %v295 = vpow.pop %v294
          %v296 = vld [vmem:[#allocation4] sm:$0x3]
          %v297 = vmul.f32 %v284, %v296
          %v300 = vrot.slane %v295, 7
          %v301 = vsel %vm278, %v293, %v300
          %v303 = vadd.f32 %v297, %v301
          %v304 = vlaneseq
          %vm305 = vcmp.ge.s32.totalorder %v304, 0
          %vm306 = vcmp.lt.s32.totalorder %v304, 256
          %vm307 = vmand %vm305, %vm306
          %308 = vst.msk [vmem:[#allocation4] sm:$0x3] %vm307, %v303
          %v309 = vld [vmem:[#allocation5] sm:$0xff]
          %v311 = vperm.slane %v284, 0
          %v312 = vperm.slane %v284, 1
          %316 = vst [vmem:[#allocation1] ss:$2 sm:$0xff] %v309
          %v317 = vld.sshfl [vmem:[#allocation1] sm:$0xff pattern:$0x75316420]
          %v318 = vld.sshfl [vmem:[#allocation1 + $0x8] sm:$0xff pattern:$0x75316420]
          %v321 = vmul.f32 %v311, %v317
          %v322 = vmul.f32 %v312, %v318
          %v323 = vperm.slane %v293, 0
          %v324 = vperm.slane %v295, 0
          %326 = vst [vmem:[#allocation1] ss:$2 sm:$0xff] %v250
          %v327 = vld.sshfl [vmem:[#allocation1] sm:$0xff pattern:$0x75316420]
          %v328 = vld.sshfl [vmem:[#allocation1 + $0x8] sm:$0xff pattern:$0x75316420]
          %v331 = vmul.f32 %v323, %v327
          %v332 = vmul.f32 %v324, %v328
          %v333 = vadd.f32 %v321, %v331
          %v334 = vadd.f32 %v322, %v332
          %v337 = vrot.slane %v334, 4
          %v338 = vsel %vm259, %v333, %v337
          %340 = vst [vmem:[#allocation5] sm:$0xff] %v338
          %341 = vst.msk [vmem:[#allocation3] sm:$0x3] %vm307, %v281
        $region36: #{tpu_custom_call.1} parent=23 // pred_fallthru
          _
        %p342 = scmp.eq.s32.totalorder %s40, 2
        // Predicated region
        $region37: #{tpu_custom_call.1} parent=23 // pred_check
          %p343 = pneg %p342
        $region38: #{tpu_custom_call.1} parent=23 // pred_check_branch
          %345 = sbr.rel (%p343) target = $region40
        $region39: #{tpu_custom_call.1} parent=23 // pred_region
          %v346 = vld [vmem:[#allocation4] sm:$0x3]
          %v347 = vrcp.pop %v346
          %v348 = vmul.f32 %v346, %v347
          %v349 = vsub.f32 1.0, %v348
          %v350 = vmul.f32 %v347, %v349
          %v351 = vadd.f32 %v347, %v350
          %vm352 = vweird.f32 %v346
          %vm353 = vweird.f32 %v347
          %vm354 = vmor %vm352, %vm353
          %v355 = vsel %vm354, %v347, %v351
          %v356 = vand.u32 2147483647, %v346
          %vm357 = vcmp.eq.f32.partialorder %v356, 8.507059e+37
          %v358 = vand.u32 %v346, 2147483648
          %v359 = vor.u32 1.1754944e-38, %v358
          %v360 = vsel %vm357, %v359, %v355
          %v361 = vld [vmem:[#allocation5] sm:$0xff]
          %v363 = vperm.slane %v360, 0
          %v364 = vperm.slane %v360, 1
          %v365 = vrot.slane %v364, 4
          %vm366 = vcmask 1043456
          %v367 = vsel %vm366, %v363, %v365
          %v369 = vmul.f32 %v361, %v367
          %370 = vst [vmem:[%s192] sm:$0xff] %v369
        $region40: #{tpu_custom_call.1} parent=23 // pred_fallthru
          _
        %s371 = sand.u32 %s102, 1
        %s372 = scalar_lea.sflag [#allocation11], %s371
        %s373 = sand.u32 %s102, 1
        %s374 = smul.addr %s373, 8
        %s375 = scalar_lea.vmem [#allocation12], %s374
        // Predicated region
        $region41: #{tpu_custom_call.1} parent=23 // pred_check
          %p376 = pneg %p112
        $region42: #{tpu_custom_call.1} parent=23 // pred_check_branch
          %378 = sbr.rel (%p376) target = $region44
        $region43: #{tpu_custom_call.1} parent=23 // pred_region
          %s379 = smul.u32 2, %s39
          %381 = vsyncadd %s372, 0
          %s382 = smul.addr %s38, 2
          %s383 = sadd.s32 %s379, %s382
          %s384 = smul.addr %s383, 4
          %s385 = scalar_lea.hbm %s3, %s384
          %s387 = sshll.u32 %s375, 4
          %s388 = int_to_ptr.vmem [resolvable:$true] %s387
          %s389 = sshll.u32 %s385, 4
          %s390 = int_to_ptr.hbm [resolvable:$true] %s389
          %392 = dma.vmem_to_hbm [thread:$0]  %s388, 128, %s390, %s372
        $region44: #{tpu_custom_call.1} parent=23 // pred_fallthru
          _
      $region24: #{tpu_custom_call.1} parent=5 // pred_fallthru
        _
      %p393 = scmp.le.s32.totalorder 2, %s28
      // Predicated region
      $region45: #{tpu_custom_call.1} parent=5 // pred_check
        %p394 = pneg %p393
      $region46: #{tpu_custom_call.1} parent=5 // pred_check_branch
        %396 = sbr.rel (%p394) target = $region48
      $region47: #{tpu_custom_call.1} parent=5 // pred_region
        %s397 = ssub.s32 %s28, 2
        // Predicated region
        $region49: #{tpu_custom_call.1} parent=47 // pred_check
          %p398 = pneg %p118
        $region50: #{tpu_custom_call.1} parent=47 // pred_check_branch
          %400 = sbr.rel (%p398) target = $region52
        $region51: #{tpu_custom_call.1} parent=47 // pred_region
          %s401 = sand.u32 %s103, 1
          %s402 = scalar_lea.sflag [#allocation11], %s401
          %s403 = sand.u32 %s103, 1
          %s404 = smul.addr %s403, 8
          %s405 = scalar_lea.vmem [#allocation12], %s404
          %407 = dma.done %s402, 128
        $region52: #{tpu_custom_call.1} parent=47 // pred_fallthru
          _
      $region48: #{tpu_custom_call.1} parent=5 // pred_fallthru
        _
    $region6: #{tpu_custom_call.1} parent=1 // loop_footer
      %s32 = sadd.s32 1, %s28
    $region7: #{tpu_custom_call.1} parent=1 // loop_footer_branch
      %27 = sbr.rel target = $region3
    $region8: #{tpu_custom_call.1} parent=1 // loop_exit
      _
    %408 = vsyncpa [#allocation10], 1
    %s409 = scalar_lea.sflag [#allocation10], 1
    %410 = vsyncpa %s409, 1
    %411 = vsyncpa [#allocation11], 1
    %s412 = scalar_lea.sflag [#allocation11], 1
    %413 = vsyncpa %s412, 1

</llo_original>
